<compile_context>
chip_gen: v6e
topology: v6e:2x2x1
jax: 0.10.0
libtpu: 0.0.40
codegen_flags: <defaults>
</compile_context>

<pallas_src>
import functools
import numpy as np

import jax
import jax.numpy as jnp
from jax.experimental import pallas as pl
from jax.experimental.pallas import tpu as pltpu


# ----------------------------------------------------------------------------
# Deterministic, synthetic chord similarity (the PyTorch module only consumes
# the resulting (C, C) matrix; this stands in for the project's helper).
# ----------------------------------------------------------------------------
_ROOTS = ["C", "C#", "D", "D#", "E", "F", "F#", "G", "G#", "A", "A#", "B"]


def _parse_chord(chord):
    if chord in ("N", "Unknown"):
        return None, None
    if len(chord) > 1 and chord[1] == "#":
        root, qual = chord[:2], chord[2:]
    else:
        root, qual = chord[:1], chord[1:]
    return root, ("min" if qual == "m" else "maj")


def chord_similarity(a, b):
    if a == b:
        return 1.0
    ra, qa = _parse_chord(a)
    rb, qb = _parse_chord(b)
    if ra is None or rb is None:
        return 0.0
    ia, ib = _ROOTS.index(ra), _ROOTS.index(rb)
    fa, fb = (ia * 7) % 12, (ib * 7) % 12          # circle-of-fifths distance
    d = min((fa - fb) % 12, (fb - fa) % 12)
    sim = 1.0 - d / 6.0
    if qa != qb:
        sim *= 0.6
    return float(max(0.0, sim))


def build_chord_similarity_matrix(idx_to_chord):
    n = len(idx_to_chord)
    m = np.zeros((n, n), dtype=np.float32)
    for i in range(n):
        for j in range(n):
            m[i, j] = chord_similarity(
                idx_to_chord.get(i, "Unknown"), idx_to_chord.get(j, "Unknown")
            )
    return jnp.asarray(m)


def _round_up(x, m):
    return ((x + m - 1) // m) * m


def _default_num_splits():
    """2-way megacore split only on v7x (2 TCs/chip); v5e/v6e are single-TC."""
    try:
        kind = jax.devices()[0].device_kind.lower()
    except Exception:
        return 1
    return 2 if ("v7" in kind or "7x" in kind) else 1


# ----------------------------------------------------------------------------
# Pallas kernel body: one (TB, C) batch tile per grid step.
# ----------------------------------------------------------------------------
def _chord_loss_kernel(logits_ref, tgt_ref, dist_ref, out_ref, acc_ref,
                       *, ignore_index, true_batch):
    i = pl.program_id(0)            # TensorCore split (parallel axis)
    j = pl.program_id(1)            # tile within split (arbitrary / reduction axis)
    tps = pl.num_programs(1)

    @pl.when(j == 0)
    def _init():
        acc_ref[...] = jnp.zeros_like(acc_ref)

    logits = logits_ref[...].astype(jnp.float32)    # (TB, C) cast after VMEM load
    tgt = tgt_ref[...]                              # (TB, 1) int32
    TB, C = logits.shape

    # Softmax pieces (normalization deferred to a single per-row divide).
    m = jnp.max(logits, axis=-1, keepdims=True)                 # XLU lane reduce
    e = jnp.exp(logits - m)                                     # EUP
    den = jnp.sum(e, axis=-1, keepdims=True)                    # XLU lane reduce

    # Distance-weighted error on un-normalized e; class weights are already folded
    # into dist columns in the wrapper.  MXU (tiny K=N=C), full-f32 precision.
    dwe = jnp.dot(e, dist_ref[...],
                  preferred_element_type=jnp.float32,
                  precision=jax.lax.Precision.HIGHEST)          # (TB, C)

    # Validity mask: padded tail rows (global row >= true B) and ignore_index rows.
    row = jax.lax.broadcasted_iota(jnp.int32, (TB, 1), 0)
    global_row = (i * tps + j) * TB + row
    valid = global_row < true_batch
    if ignore_index >= 0:
        valid = jnp.logical_and(valid, tgt != ignore_index)
    scale = jnp.where(valid, 1.0 / den, 0.0)                    # (TB, 1) exact divide

    # Select the target column via iota-compare (no gather, no one-hot matmul);
    # the only nonzero lane per row is dwe[b, tgt_b] / den_b * valid_b.
    cls = jax.lax.broadcasted_iota(jnp.int32, (TB, C), 1)
    z = jnp.where(cls == tgt, dwe, 0.0) * scale                 # (TB, C)

    # Batch reduction as cross-vreg VPU adds (no XLU sublane reduce, no SMEM round
    # trip): fold groups of 8 rows (one vreg) into the resident (8, C) accumulator.
    acc_ref[...] += jnp.sum(z.reshape(TB // 8, 8, C), axis=0)

    @pl.when(j == tps - 1)
    def _finalize():
        # Single scalar reduce per split; lane-dense (8,128) partial block per split.
        total = jnp.sum(acc_ref[...]) * (1.0 / true_batch)
        out_ref[...] = jnp.zeros_like(out_ref) + total


# ----------------------------------------------------------------------------
# Wrapper matching ChordAwareLoss.forward(logits, targets).
# ----------------------------------------------------------------------------
def chord_aware_loss(logits, targets, dist_matrix, class_weights=None,
                     ignore_index=-100, block_rows=8192, num_splits=None):
    B, C = logits.shape
    itemsize = jnp.dtype(logits.dtype).itemsize

    if num_splits is None:
        num_splits = _default_num_splits()

    # ---- batch tile size (lane-padding aware) --------------------------------
    # VMEM per row of a double-buffered tile (C=24 lane-pads to 128 lanes):
    #   logits: 128 * itemsize ; targets (int32, lane-padded): 128 * 4
    row_bytes = 128 * itemsize + 128 * 4
    tb_vmem_cap = max(32, ((24 << 20) // (2 * row_bytes)) // 32 * 32)
    tb = min(_round_up(max(block_rows, 32), 32),
             _round_up(pl.cdiv(B, max(num_splits, 1)), 32),
             tb_vmem_cap)

    num_tiles = pl.cdiv(B, tb)
    nsplit = max(1, min(num_splits, num_tiles))      # v7x: split batch across 2 TCs
    tiles_per_split = pl.cdiv(num_tiles, nsplit)
    padded_B = nsplit * tiles_per_split * tb

    tgt = targets.astype(jnp.int32)
    if padded_B != B:
        logits_p = jnp.pad(logits, ((0, padded_B - B), (0, 0)))
        tgt = jnp.pad(tgt, (0, padded_B - B))
    else:
        logits_p = logits
    tgt2d = tgt.reshape(padded_B, 1)

    dist = jnp.asarray(dist_matrix, jnp.float32)
    if class_weights is not None:
        cw = jnp.asarray(class_weights, jnp.float32).reshape(1, C)
        dist_w = dist * cw           # dist_w[c, t] = dist[c, t] * cw[t]  (tiny, once)
    else:
        dist_w = dist

    kernel = functools.partial(_chord_loss_kernel,
                               ignore_index=ignore_index, true_batch=B)

    # Double-buffered input streams + margin for dist / output / accumulator.
    vmem_need = 2 * tb * row_bytes + (2 << 20)
    vmem_limit = int(min(max(vmem_need * 5 // 4, 32 << 20), 56 << 20))

    cost = pl.CostEstimate(
        flops=2 * padded_B * C * C + 8 * padded_B * C,
        transcendentals=padded_B * C,
        bytes_accessed=(padded_B * C * itemsize + padded_B * 4
                        + C * C * 4 + nsplit * 8 * 128 * 4))

    tps = tiles_per_split
    out = pl.pallas_call(
        kernel,
        out_shape=jax.ShapeDtypeStruct((nsplit * 8, 128), jnp.float32),
        grid_spec=pltpu.PrefetchScalarGridSpec(
            num_scalar_prefetch=0,
            grid=(nsplit, tps),
            in_specs=[
                pl.BlockSpec((tb, C), lambda i, j: (i * tps + j, 0)),   # logits tile
                pl.BlockSpec((tb, 1), lambda i, j: (i * tps + j, 0)),   # targets tile
                pl.BlockSpec((C, C), lambda i, j: (0, 0)),              # dist_w (resident)
            ],
            out_specs=pl.BlockSpec((8, 128), lambda i, j: (i, 0)),
            scratch_shapes=[pltpu.VMEM((8, C), jnp.float32)],
        ),
        compiler_params=pltpu.CompilerParams(
            dimension_semantics=("parallel", "arbitrary"),
            vmem_limit_bytes=vmem_limit),
        cost_estimate=cost,
    )(logits_p, tgt2d, dist_w)

    partials = out.reshape(nsplit, 8, 128)[:, 0, 0]
    return jnp.maximum(jnp.sum(partials), 0.0)       # clamp(min=0.0) on the mean


# ----------------------------------------------------------------------------
# Pure-JAX reference (mirrors the PyTorch forward) for verification.
# ----------------------------------------------------------------------------
def chord_aware_loss_ref(logits, targets, dist_matrix, class_weights=None,
                         ignore_index=-100):
    B, C = logits.shape
    target_oh = jax.nn.one_hot(targets, C, dtype=jnp.float32)
    if ignore_index >= 0:
        mask = (targets != ignore_index).astype(jnp.float32)[:, None]
        target_oh = target_oh * mask
    probs = jax.nn.softmax(logits.astype(jnp.float32), axis=1)
    dwe = jnp.matmul(probs, dist_matrix, precision=jax.lax.Precision.HIGHEST)
    loss = jnp.sum(target_oh * dwe, axis=1)
    if class_weights is not None:
        cw = jnp.asarray(class_weights, jnp.float32)[targets]
        if ignore_index >= 0:
            cw = jnp.where(targets == ignore_index, 0.0, cw)
        loss = loss * cw
    return jnp.maximum(loss.mean(), 0.0)


if __name__ == "__main__":
    # 24 chord classes: 12 major + 12 minor.
    idx_to_chord = {}
    for i, r in enumerate(_ROOTS):
        idx_to_chord[i] = r
        idx_to_chord[12 + i] = r + "m"

    sim_matrix = build_chord_similarity_matrix(idx_to_chord)     # (24, 24)
    dist_matrix = (1.0 - sim_matrix).astype(jnp.float32)         # precomputed once

    C = len(idx_to_chord)
    key = jax.random.PRNGKey(0)
    k1, k2, k3, k4 = jax.random.split(key, 4)

    # 1) Default config: small batch, f32 logits, ignore_index=-100, no class weights.
    B = 8
    logits = jax.random.normal(k1, (B, C), dtype=jnp.float32)
    targets = jax.random.randint(k2, (B,), 0, C, dtype=jnp.int32)
    loss = jax.block_until_ready(chord_aware_loss(logits, targets, dist_matrix))
    ref = chord_aware_loss_ref(logits, targets, dist_matrix)
    assert jnp.allclose(loss, ref, atol=1e-4, rtol=1e-4), (loss, ref)

    # 2) Multi-tile path: 2 tiles per split, 2-way split, tail masking, bf16 ingest,
    #    ignore_index + class weights.
    B2 = 100
    logits2 = jax.random.normal(k3, (B2, C), dtype=jnp.float32).astype(jnp.bfloat16)
    targets2 = jax.random.randint(k4, (B2,), 0, C, dtype=jnp.int32).at[0].set(3)
    cw = jnp.linspace(0.5, 1.5, C, dtype=jnp.float32)
    loss2 = jax.block_until_ready(
        chord_aware_loss(logits2, targets2, dist_matrix, class_weights=cw,
                         ignore_index=3, block_rows=32, num_splits=2))
    ref2 = chord_aware_loss_ref(logits2.astype(jnp.float32), targets2, dist_matrix,
                                class_weights=cw, ignore_index=3)
    assert jnp.allclose(loss2, ref2, atol=2e-4, rtol=2e-4), (loss2, ref2)

    print("KERNEL_OK")
</pallas_src>

<mosaic_0001>
module attributes {stable_mosaic.version = 11 : i64} {
  func.func @_chord_loss_kernel(%arg0: i32, %arg1: i32, %arg2: memref<32x24xf32, #tpu.memory_space<vmem>>, %arg3: memref<32x1xi32, #tpu.memory_space<vmem>>, %arg4: memref<24x24xf32, #tpu.memory_space<vmem>>, %arg5: memref<8x128xf32, #tpu.memory_space<vmem>>, %arg6: memref<8x24xf32, #tpu.memory_space<vmem>>) attributes {dimension_semantics = [#tpu.dimension_semantics<parallel>, #tpu.dimension_semantics<arbitrary>], iteration_bounds = array<i64: 1, 1>, scalar_prefetch = 0 : i64, scratch_operands = 1 : i64, tpu.core_type = #tpu.core_type<tc>, window_params = [{transform_indices = @transform_0, window_bounds = array<i64: 32, 24>}, {transform_indices = @transform_1, window_bounds = array<i64: 32, 1>}, {pipeline_mode = #tpu.pipeline_mode<synchronous>, transform_indices = @transform_2, window_bounds = array<i64: 24, 24>}, {transform_indices = @transform_3, window_bounds = array<i64: 8, 128>}]} {
    %c0_i32 = arith.constant 0 : i32
    %0 = arith.cmpi eq, %arg1, %c0_i32 : i32
    %1 = arith.extui %0 : i1 to i32
    %c0_i32_0 = arith.constant 0 : i32
    %2 = arith.cmpi ne, %1, %c0_i32_0 : i32
    scf.if %2 {
      %cst_18 = arith.constant 0.000000e+00 : f32
      %41 = vector.broadcast %cst_18 : f32 to vector<8x24xf32>
      %c0_19 = arith.constant 0 : index
      %c0_20 = arith.constant 0 : index
      %42 = vector.load %arg6[%c0_19, %c0_20] : memref<8x24xf32, #tpu.memory_space<vmem>>, vector<8x24xf32>
      tpu.vector_store %arg6[%c0_19, %c0_20], %41 {strides = array<i32>} : memref<8x24xf32, #tpu.memory_space<vmem>>, vector<8x24xf32>,
    } else {
    }
    %c0 = arith.constant 0 : index
    %c0_1 = arith.constant 0 : index
    %3 = vector.load %arg2[%c0, %c0_1] : memref<32x24xf32, #tpu.memory_space<vmem>>, vector<32x24xf32>
    %c0_2 = arith.constant 0 : index
    %c0_3 = arith.constant 0 : index
    %4 = vector.load %arg3[%c0_2, %c0_3] : memref<32x1xi32, #tpu.memory_space<vmem>>, vector<32x1xi32>
    %cst = arith.constant dense<0xFF800000> : vector<32xf32>
    %5 = vector.multi_reduction <maximumf>, %3, %cst [1] : vector<32x24xf32> to vector<32xf32>
    %6 = vector.shape_cast %5 : vector<32xf32> to vector<32x1xf32>
    %7 = vector.broadcast %6 : vector<32x1xf32> to vector<32x24xf32>
    %8 = arith.subf %3, %7 : vector<32x24xf32>
    %9 = math.exp %8 : vector<32x24xf32>
    %cst_4 = arith.constant dense<0.000000e+00> : vector<32xf32>
    %10 = vector.multi_reduction <add>, %9, %cst_4 [1] : vector<32x24xf32> to vector<32xf32>
    %11 = vector.shape_cast %10 : vector<32xf32> to vector<32x1xf32>
    %c0_5 = arith.constant 0 : index
    %c0_6 = arith.constant 0 : index
    %12 = vector.load %arg4[%c0_5, %c0_6] : memref<24x24xf32, #tpu.memory_space<vmem>>, vector<24x24xf32>
    %cst_7 = arith.constant dense<0.000000e+00> : vector<32x24xf32>
    %13 = tpu.matmul %9, %12, %cst_7 {dimension_numbers = #tpu.dot_dimension_numbers<[1], [0], [0], [1], [0, 0, 1, 1], [], []>, precision = #tpu.contract_precision<fp32>} : vector<32x24xf32>, vector<24x24xf32>, vector<32x24xf32> -> vector<32x24xf32>
    %14 = tpu.iota {dimensions = array<i32: 0>} : vector<32x1xi32>
    %c1_i32 = arith.constant 1 : i32
    %15 = arith.muli %arg0, %c1_i32 : i32
    %16 = arith.addi %15, %arg1 : i32
    %c32_i32 = arith.constant 32 : i32
    %17 = arith.muli %16, %c32_i32 : i32
    %18 = vector.broadcast %17 : i32 to vector<32x1xi32>
    %19 = arith.addi %18, %14 : vector<32x1xi32>
    %c8_i32 = arith.constant 8 : i32
    %20 = vector.broadcast %c8_i32 : i32 to vector<32x1xi32>
    %21 = arith.cmpi slt, %19, %20 : vector<32x1xi32>
    %cst_8 = arith.constant 1.000000e+00 : f32
    %22 = vector.broadcast %cst_8 : f32 to vector<32x1xf32>
    %23 = arith.divf %22, %11 : vector<32x1xf32>
    %cst_9 = arith.constant 0.000000e+00 : f32
    %24 = vector.broadcast %cst_9 : f32 to vector<32x1xf32>
    %25 = arith.select %21, %23, %24 : vector<32x1xi1>, vector<32x1xf32>
    %26 = tpu.iota {dimensions = array<i32: 1>} : vector<32x24xi32>
    %27 = vector.broadcast %4 : vector<32x1xi32> to vector<32x24xi32>
    %28 = arith.cmpi eq, %26, %27 : vector<32x24xi32>
    %cst_10 = arith.constant 0.000000e+00 : f32
    %29 = vector.broadcast %cst_10 : f32 to vector<32x24xf32>
    %30 = arith.select %28, %13, %29 : vector<32x24xi1>, vector<32x24xf32>
    %31 = vector.broadcast %25 : vector<32x1xf32> to vector<32x24xf32>
    %32 = arith.mulf %30, %31 : vector<32x24xf32>
    %c0_11 = arith.constant 0 : index
    %c0_12 = arith.constant 0 : index
    %33 = vector.load %arg6[%c0_11, %c0_12] : memref<8x24xf32, #tpu.memory_space<vmem>>, vector<8x24xf32>
    %34 = vector.shape_cast %32 : vector<32x24xf32> to vector<4x8x24xf32>
    %cst_13 = arith.constant dense<0.000000e+00> : vector<8x24xf32>
    %35 = vector.multi_reduction <add>, %34, %cst_13 [0] : vector<4x8x24xf32> to vector<8x24xf32>
    %36 = arith.addf %33, %35 : vector<8x24xf32>
    %c0_14 = arith.constant 0 : index
    %c0_15 = arith.constant 0 : index
    %37 = vector.load %arg6[%c0_14, %c0_15] : memref<8x24xf32, #tpu.memory_space<vmem>>, vector<8x24xf32>
    tpu.vector_store %arg6[%c0_14, %c0_15], %36 {strides = array<i32>} : memref<8x24xf32, #tpu.memory_space<vmem>>, vector<8x24xf32>,
    %c0_i32_16 = arith.constant 0 : i32
    %38 = arith.cmpi eq, %arg1, %c0_i32_16 : i32
    %39 = arith.extui %38 : i1 to i32
    %c0_i32_17 = arith.constant 0 : i32
    %40 = arith.cmpi ne, %39, %c0_i32_17 : i32
    scf.if %40 {
      %c0_18 = arith.constant 0 : index
      %c0_19 = arith.constant 0 : index
      %41 = vector.load %arg6[%c0_18, %c0_19] : memref<8x24xf32, #tpu.memory_space<vmem>>, vector<8x24xf32>
      %42 = vector.shape_cast %41 : vector<8x24xf32> to vector<1x8x24xf32>
      %cst_20 = arith.constant dense<0.000000e+00> : vector<1xf32>
      %43 = vector.multi_reduction <add>, %42, %cst_20 [1, 2] : vector<1x8x24xf32> to vector<1xf32>
      %44 = vector.shape_cast %43 : vector<1xf32> to vector<1x1x1xf32>
      %45 = vector.extract %44[0, 0, 0] : f32 from vector<1x1x1xf32>
      %cst_21 = arith.constant 1.250000e-01 : f32
      %46 = arith.mulf %45, %cst_21 : f32
      %cst_22 = arith.constant 0.000000e+00 : f32
      %47 = vector.broadcast %cst_22 : f32 to vector<8x128xf32>
      %48 = vector.broadcast %46 : f32 to vector<8x128xf32>
      %49 = arith.addf %47, %48 : vector<8x128xf32>
      %c0_23 = arith.constant 0 : index
      %c0_24 = arith.constant 0 : index
      %50 = vector.load %arg5[%c0_23, %c0_24] : memref<8x128xf32, #tpu.memory_space<vmem>>, vector<8x128xf32>
      tpu.vector_store %arg5[%c0_23, %c0_24], %49 {strides = array<i32>} : memref<8x128xf32, #tpu.memory_space<vmem>>, vector<8x128xf32>,
    } else {
    }
    return
  }
  func.func @transform_0(%arg0: i32, %arg1: i32) -> (i32, i32) {
    %c1_i32 = arith.constant 1 : i32
    %0 = arith.muli %arg0, %c1_i32 : i32
    %1 = arith.addi %0, %arg1 : i32
    %c0_i32 = arith.constant 0 : i32
    %c0_i32_0 = arith.constant 0 : i32
    return %1, %c0_i32 : i32, i32
  }
  func.func @transform_1(%arg0: i32, %arg1: i32) -> (i32, i32) {
    %c1_i32 = arith.constant 1 : i32
    %0 = arith.muli %arg0, %c1_i32 : i32
    %1 = arith.addi %0, %arg1 : i32
    %c0_i32 = arith.constant 0 : i32
    %c0_i32_0 = arith.constant 0 : i32
    return %1, %c0_i32 : i32, i32
  }
  func.func @transform_2(%arg0: i32, %arg1: i32) -> (i32, i32) {
    %c0_i32 = arith.constant 0 : i32
    %c0_i32_0 = arith.constant 0 : i32
    %c0_i32_1 = arith.constant 0 : i32
    return %c0_i32, %c0_i32_0 : i32, i32
  }
  func.func @transform_3(%arg0: i32, %arg1: i32) -> (i32, i32) {
    %c0_i32 = arith.constant 0 : i32
    %c0_i32_0 = arith.constant 0 : i32
    return %arg0, %c0_i32 : i32, i32
  }
}

</mosaic_0001>

<llo_original>
// kernel: tpu_custom_call.1
$region0: #{tpu_custom_call.1}
  #allocation0 [shape = 'u32[]', space=smem, size = 0x4, offset = 0x4, fixed_abs, tag = 'smem constant byte address 0x4 - core index']
  #allocation1 [shape = 'u32[144,128]{1,0:T(1,128)}', space=vmem, size = 0x12000, scoped, tag = 'internal scratch']
  #allocation2 [shape = 'f32[8,24]{1,0:T(8,128)}', space=vmem, size = 0x1000, scoped, tag = 'scratch operand']
  %s0 = inlined_call_operand.vmem [shape: f32[32,24], index: 0, kind: input, shape index: {}]
  %s1 = inlined_call_operand.vmem [shape: s32[32,1], index: 1, kind: input, shape index: {}]
  %s2 = inlined_call_operand.vmem [shape: f32[24,24], index: 2, kind: input, shape index: {}]
  %s3 = inlined_call_operand.hbm [shape: f32[8,128], index: 3, kind: output, shape index: {}]
  %s4 = sld [smem:[#allocation0]]
  $region30: #{tpu_custom_call.1} parent=0
    _
  %s6 = ssub.s32 1, %s4
  %s7 = scalar_select 0, %s6, %s4
  $region1: #{tpu_custom_call.1} parent=0
    #allocation3 [shape = 'u8[4096]{0}', space=vmem, size = 0x1000, scoped, tag = 'output window, operand 0, single buffered']
    #allocation4 [shape = 's32[1]{0}', space=sflag, size = 0x4, scoped, tag = 'scoped memory for tpu_custom_call.1']
    %8 = vsyncpa [#allocation4], 0
    // Predicated region
    $region2: #{tpu_custom_call.1} parent=1 // pred_check
      _
    $region3: #{tpu_custom_call.1} parent=1 // pred_check_branch
      %10 = sbr.rel (0) target = $region5
    $region4: #{tpu_custom_call.1} parent=1 // pred_region
      %s11 = sadd.s32 0, 0
      %s12 = smul.u32 4, %s11
      %p13 = scmp.lt.s32.totalorder %s12, 3
      %s14 = scalar_select %p13, %s12, 3
      %s15 = smul.addr %s14, 8
      %s16 = scalar_lea.vmem %s0, %s15
      %s17 = sadd.s32 0, 0
      %s18 = smul.u32 4, %s17
    $region5: #{tpu_custom_call.1} parent=1 // pred_fallthru
      _
    // Predicated region
    $region6: #{tpu_custom_call.1} parent=1 // pred_check
      _
    $region7: #{tpu_custom_call.1} parent=1 // pred_check_branch
      %20 = sbr.rel (0) target = $region9
    $region8: #{tpu_custom_call.1} parent=1 // pred_region
      %s21 = sadd.s32 0, 0
      %s22 = smul.u32 4, %s21
      %p23 = scmp.lt.s32.totalorder %s22, 3
      %s24 = scalar_select %p23, %s22, 3
      %s25 = smul.addr %s24, 8
      %s26 = scalar_lea.vmem %s1, %s25
      %s27 = sadd.s32 0, 0
      %s28 = smul.u32 4, %s27
    $region9: #{tpu_custom_call.1} parent=1 // pred_fallthru
      _
    // Predicated region
    $region10: #{tpu_custom_call.1} parent=1 // pred_check
      _
    $region11: #{tpu_custom_call.1} parent=1 // pred_check_branch
      %30 = sbr.rel (0) target = $region13
    $region12: #{tpu_custom_call.1} parent=1 // pred_region
      _
    $region13: #{tpu_custom_call.1} parent=1 // pred_fallthru
      _
    %s31 = sadd.s32 0, 0
    %s32 = smul.u32 4, %s31
    %p33 = scmp.lt.s32.totalorder %s32, 3
    %s34 = scalar_select %p33, %s32, 3
    %s35 = smul.addr %s34, 8
    %s36 = scalar_lea.vmem %s0, %s35
    %s37 = sadd.s32 0, 0
    %s38 = smul.u32 4, %s37
    %p39 = scmp.lt.s32.totalorder %s38, 3
    %s40 = scalar_select %p39, %s38, 3
    %s41 = smul.addr %s40, 8
    %s42 = scalar_lea.vmem %s1, %s41
    %s43 = sadd.s32 0, 0
    %s44 = smul.u32 4, %s43
    %p45 = scmp.lt.s32.totalorder %s44, 3
    %s46 = scalar_select %p45, %s44, 3
    %s47 = smul.addr %s46, 8
    %s48 = scalar_lea.vmem %s0, %s47
    %s49 = sadd.s32 0, 0
    %s50 = smul.u32 4, %s49
    %s51 = sadd.s32 0, 0
    %s52 = smul.u32 4, %s51
    %p53 = scmp.lt.s32.totalorder %s52, 3
    %s54 = scalar_select %p53, %s52, 3
    %s55 = smul.addr %s54, 8
    %s56 = scalar_lea.vmem %s1, %s55
    %s57 = sadd.s32 0, 0
    %s58 = smul.u32 4, %s57
    %p59 = scmp.eq.s32.totalorder 0, 0
    // Predicated region
    $region14: #{tpu_custom_call.1} parent=1 // pred_check
      %p60 = pneg %p59
    $region15: #{tpu_custom_call.1} parent=1 // pred_check_branch
      %62 = sbr.rel (%p60) target = $region17
    $region16: #{tpu_custom_call.1} parent=1 // pred_region
      %vm63 = vcmask 195584
      %64 = vst.msk [vmem:[#allocation2] sm:$0xff] %vm63, 0.0
    $region17: #{tpu_custom_call.1} parent=1 // pred_fallthru
      _
    %v65 = vld [vmem:[%s48] sm:$0xff]
    %v66 = vld [vmem:[%s48 + $0x8] sm:$0xff]
    %v67 = vld [vmem:[%s48 + $0x10] sm:$0xff]
    %v68 = vld [vmem:[%s48 + $0x18] sm:$0xff]
    %v69 = vld [vmem:[%s56] sm:$0xff]
    %v70 = vld [vmem:[%s56 + $0x8] sm:$0xff]
    %v71 = vld [vmem:[%s56 + $0x10] sm:$0xff]
    %v72 = vld [vmem:[%s56 + $0x18] sm:$0xff]
    %vm73 = vcmask 195584
    %v74 = vsel %vm73, %v65, -inf
    %75 = vmax.xlane.f32.xlu0 %v74
    %v76 = vpop.xlane.xlu0 %75
    %v77 = vsel %vm73, %v66, -inf
    %78 = vmax.xlane.f32.xlu0 %v77
    %v79 = vpop.xlane.xlu0 %78
    %v80 = vsel %vm73, %v67, -inf
    %81 = vmax.xlane.f32.xlu0 %v80
    %v82 = vpop.xlane.xlu0 %81
    %v83 = vsel %vm73, %v68, -inf
    %84 = vmax.xlane.f32.xlu0 %v83
    %v85 = vpop.xlane.xlu0 %84
    %v86 = vsub.f32 %v65, %v76
    %v87 = vsub.f32 %v66, %v79
    %v88 = vsub.f32 %v67, %v82
    %v89 = vsub.f32 %v68, %v85
    %v90 = vmul.f32 %v86, 1.442695
    %v91 = vpow.pop %v90
    %v92 = vmul.f32 %v87, 1.442695
    %v93 = vpow.pop %v92
    %v94 = vmul.f32 %v88, 1.442695
    %v95 = vpow.pop %v94
    %v96 = vmul.f32 %v89, 1.442695
    %v97 = vpow.pop %v96
    %v98 = vsel %vm73, %v91, 0.0
    %99 = vadd.xlane.f32.xlu0 %v98
    %v100 = vpop.xlane.xlu0 %99
    %v101 = vsel %vm73, %v93, 0.0
    %102 = vadd.xlane.f32.xlu0 %v101
    %v103 = vpop.xlane.xlu0 %102
    %v104 = vsel %vm73, %v95, 0.0
    %105 = vadd.xlane.f32.xlu0 %v104
    %v106 = vpop.xlane.xlu0 %105
    %v107 = vsel %vm73, %v97, 0.0
    %108 = vadd.xlane.f32.xlu0 %v107
    %v109 = vpop.xlane.xlu0 %108
    %v110 = vld [vmem:[%s2] sm:$0xff]
    %v111 = vld [vmem:[%s2 + $0x8] sm:$0xff]
    %v112 = vld [vmem:[%s2 + $0x10] sm:$0xff]
    %v114 = vsel %vm73, %v91, 0
    %v117 = vsel %vm73, %v93, 0
    %v120 = vsel %vm73, %v95, 0
    %v123 = vsel %vm73, %v97, 0
    %125 = vmatprep.subr.mxu0 0.0
    %126 = vmatpush1.msra.mxu0 0.0
    %127 = vmatprep.subr.mxu0 0.0
    %128 = vmatpush1.msra.mxu0 0.0
    %129 = vmatprep.subr.mxu0 0.0
    %130 = vmatpush1.msra.mxu0 0.0
    %131 = vmatprep.subr.mxu0 0.0
    %132 = vmatpush1.msra.mxu0 0.0
    %133 = vmatprep.subr.mxu0 0.0
    %134 = vmatpush1.msra.mxu0 0.0
    %135 = vmatprep.subr.mxu0 0.0
    %136 = vmatpush1.msra.mxu0 0.0
    %137 = vmatprep.subr.mxu0 0.0
    %138 = vmatpush1.msra.mxu0 0.0
    %139 = vmatprep.subr.mxu0 0.0
    %140 = vmatpush1.msra.mxu0 0.0
    %141 = vmatprep.subr.mxu0 0.0
    %142 = vmatpush1.msra.mxu0 0.0
    %143 = vmatprep.subr.mxu0 0.0
    %144 = vmatpush1.msra.mxu0 0.0
    %145 = vmatprep.subr.mxu0 0.0
    %146 = vmatpush1.msra.mxu0 0.0
    %147 = vmatprep.subr.mxu0 0.0
    %148 = vmatpush1.msra.mxu0 0.0
    %149 = vmatprep.subr.mxu0 0.0
    %150 = vmatpush1.msra.mxu0 0.0
    %151 = vmatprep.subr.mxu0 0.0
    %v152 = vand.u32 %v112, 4294901760
    %153 = vmatpush1.msra.mxu0 %v152
    %154 = vmatprep.subr.mxu0 0.0
    %v155 = vand.u32 %v111, 4294901760
    %156 = vmatpush1.msra.mxu0 %v155
    %157 = vmatprep.subr.mxu0 0.0
    %v158 = vand.u32 %v110, 4294901760
    %159 = vmatpush1.msra.mxu0 %v158
    %160 = vmatprep.subr.mxu0 0.0
    %161 = vmatpush2.msra.mxu0 0.0
    %162 = vmatprep.subr.mxu0 0.0
    %163 = vmatpush2.msra.mxu0 0.0
    %164 = vmatprep.subr.mxu0 0.0
    %165 = vmatpush2.msra.mxu0 0.0
    %166 = vmatprep.subr.mxu0 0.0
    %167 = vmatpush2.msra.mxu0 0.0
    %168 = vmatprep.subr.mxu0 0.0
    %169 = vmatpush2.msra.mxu0 0.0
    %170 = vmatprep.subr.mxu0 0.0
    %171 = vmatpush2.msra.mxu0 0.0
    %172 = vmatprep.subr.mxu0 0.0
    %173 = vmatpush2.msra.mxu0 0.0
    %174 = vmatprep.subr.mxu0 0.0
    %175 = vmatpush2.msra.mxu0 0.0
    %176 = vmatprep.subr.mxu0 0.0
    %177 = vmatpush2.msra.mxu0 0.0
    %178 = vmatprep.subr.mxu0 0.0
    %179 = vmatpush2.msra.mxu0 0.0
    %180 = vmatprep.subr.mxu0 0.0
    %181 = vmatpush2.msra.mxu0 0.0
    %182 = vmatprep.subr.mxu0 0.0
    %183 = vmatpush2.msra.mxu0 0.0
    %184 = vmatprep.subr.mxu0 0.0
    %185 = vmatpush2.msra.mxu0 0.0
    %186 = vmatprep.subr.mxu0 0.0
    %187 = vmatpush2.msra.mxu0 0.0
    %188 = vmatprep.subr.mxu0 0.0
    %189 = vmatpush2.msra.mxu0 0.0
    %190 = vmatprep.subr.mxu0 0.0
    %191 = vmatpush2.msra.mxu0 0.0
    %192 = vmatprep.mubr.f32.mxu0 0.0
    %v193 = vand.u32 %v114, 4294901760
    %v194 = vsub.f32 %v114, %v193
    %v195 = vand.u32 %v194, 4294901760
    %v196 = vsub.f32 %v194, %v195
    %v197 = vand.u32 %v196, 4294901760
    %198 = vmatmul.mubr.f32.gmra.mxu0 %v197
    %v199 = vpop.f32.mrf.mxu0
    %v200 = vadd.f32 0.0, %v199
    %v201 = vpop.f32.mrf.mxu0
    %202 = vmatprep.mubr.f32.mxu0 0.0
    %v203 = vand.u32 %v117, 4294901760
    %v204 = vsub.f32 %v117, %v203
    %v205 = vand.u32 %v204, 4294901760
    %v206 = vsub.f32 %v204, %v205
    %v207 = vand.u32 %v206, 4294901760
    %208 = vmatmul.mubr.f32.gmra.mxu0 %v207
    %v209 = vpop.f32.mrf.mxu0
    %v210 = vadd.f32 0.0, %v209
    %v211 = vpop.f32.mrf.mxu0
    %212 = vmatprep.mubr.f32.mxu0 0.0
    %v213 = vand.u32 %v120, 4294901760
    %v214 = vsub.f32 %v120, %v213
    %v215 = vand.u32 %v214, 4294901760
    %v216 = vsub.f32 %v214, %v215
    %v217 = vand.u32 %v216, 4294901760
    %218 = vmatmul.mubr.f32.gmra.mxu0 %v217
    %v219 = vpop.f32.mrf.mxu0
    %v220 = vadd.f32 0.0, %v219
    %v221 = vpop.f32.mrf.mxu0
    %222 = vmatprep.mubr.f32.mxu0 0.0
    %v223 = vand.u32 %v123, 4294901760
    %v224 = vsub.f32 %v123, %v223
    %v225 = vand.u32 %v224, 4294901760
    %v226 = vsub.f32 %v224, %v225
    %v227 = vand.u32 %v226, 4294901760
    %228 = vmatmul.mubr.f32.gmra.mxu0 %v227
    %v229 = vpop.f32.mrf.mxu0
    %v230 = vadd.f32 0.0, %v229
    %v231 = vpop.f32.mrf.mxu0
    %232 = vdwg.mxu0
    %233 = vmatprep.subr.mxu0 0.0
    %234 = vmatpush1.msra.mxu0 0.0
    %235 = vmatprep.subr.mxu0 0.0
    %236 = vmatpush1.msra.mxu0 0.0
    %237 = vmatprep.subr.mxu0 0.0
    %238 = vmatpush1.msra.mxu0 0.0
    %239 = vmatprep.subr.mxu0 0.0
    %240 = vmatpush1.msra.mxu0 0.0
    %241 = vmatprep.subr.mxu0 0.0
    %242 = vmatpush1.msra.mxu0 0.0
    %243 = vmatprep.subr.mxu0 0.0
    %244 = vmatpush1.msra.mxu0 0.0
    %245 = vmatprep.subr.mxu0 0.0
    %246 = vmatpush1.msra.mxu0 0.0
    %247 = vmatprep.subr.mxu0 0.0
    %248 = vmatpush1.msra.mxu0 0.0
    %249 = vmatprep.subr.mxu0 0.0
    %250 = vmatpush1.msra.mxu0 0.0
    %251 = vmatprep.subr.mxu0 0.0
    %252 = vmatpush1.msra.mxu0 0.0
    %253 = vmatprep.subr.mxu0 0.0
    %254 = vmatpush1.msra.mxu0 0.0
    %255 = vmatprep.subr.mxu0 0.0
    %256 = vmatpush1.msra.mxu0 0.0
    %257 = vmatprep.subr.mxu0 0.0
    %258 = vmatpush1.msra.mxu0 0.0
    %259 = vmatprep.subr.mxu0 0.0
    %v260 = vand.u32 %v112, 4294901760
    %v261 = vsub.f32 %v112, %v260
    %v262 = vand.u32 %v261, 4294901760
    %v263 = vsub.f32 %v261, %v262
    %v264 = vand.u32 %v263, 4294901760
    %265 = vmatpush1.msra.mxu0 %v264
    %266 = vmatprep.subr.mxu0 0.0
    %v267 = vand.u32 %v111, 4294901760
    %v268 = vsub.f32 %v111, %v267
    %v269 = vand.u32 %v268, 4294901760
    %v270 = vsub.f32 %v268, %v269
    %v271 = vand.u32 %v270, 4294901760
    %272 = vmatpush1.msra.mxu0 %v271
    %273 = vmatprep.subr.mxu0 0.0
    %v274 = vand.u32 %v110, 4294901760
    %v275 = vsub.f32 %v110, %v274
    %v276 = vand.u32 %v275, 4294901760
    %v277 = vsub.f32 %v275, %v276
    %v278 = vand.u32 %v277, 4294901760
    %279 = vmatpush1.msra.mxu0 %v278
    %280 = vmatprep.subr.mxu0 0.0
    %281 = vmatpush2.msra.mxu0 0.0
    %282 = vmatprep.subr.mxu0 0.0
    %283 = vmatpush2.msra.mxu0 0.0
    %284 = vmatprep.subr.mxu0 0.0
    %285 = vmatpush2.msra.mxu0 0.0
    %286 = vmatprep.subr.mxu0 0.0
    %287 = vmatpush2.msra.mxu0 0.0
    %288 = vmatprep.subr.mxu0 0.0
    %289 = vmatpush2.msra.mxu0 0.0
    %290 = vmatprep.subr.mxu0 0.0
    %291 = vmatpush2.msra.mxu0 0.0
    %292 = vmatprep.subr.mxu0 0.0
    %293 = vmatpush2.msra.mxu0 0.0
    %294 = vmatprep.subr.mxu0 0.0
    %295 = vmatpush2.msra.mxu0 0.0
    %296 = vmatprep.subr.mxu0 0.0
    %297 = vmatpush2.msra.mxu0 0.0
    %298 = vmatprep.subr.mxu0 0.0
    %299 = vmatpush2.msra.mxu0 0.0
    %300 = vmatprep.subr.mxu0 0.0
    %301 = vmatpush2.msra.mxu0 0.0
    %302 = vmatprep.subr.mxu0 0.0
    %303 = vmatpush2.msra.mxu0 0.0
    %304 = vmatprep.subr.mxu0 0.0
    %305 = vmatpush2.msra.mxu0 0.0
    %306 = vmatprep.subr.mxu0 0.0
    %307 = vmatpush2.msra.mxu0 0.0
    %308 = vmatprep.subr.mxu0 0.0
    %309 = vmatpush2.msra.mxu0 0.0
    %310 = vmatprep.subr.mxu0 0.0
    %311 = vmatpush2.msra.mxu0 0.0
    %312 = vmatprep.mubr.f32.mxu0 0.0
    %v313 = vand.u32 %v114, 4294901760
    %314 = vmatmul.mubr.f32.gmra.mxu0 %v313
    %v315 = vpop.f32.mrf.mxu0
    %v316 = vadd.f32 %v200, %v315
    %v317 = vpop.f32.mrf.mxu0
    %318 = vmatprep.mubr.f32.mxu0 0.0
    %v319 = vand.u32 %v117, 4294901760
    %320 = vmatmul.mubr.f32.gmra.mxu0 %v319
    %v321 = vpop.f32.mrf.mxu0
    %v322 = vadd.f32 %v210, %v321
    %v323 = vpop.f32.mrf.mxu0
    %324 = vmatprep.mubr.f32.mxu0 0.0
    %v325 = vand.u32 %v120, 4294901760
    %326 = vmatmul.mubr.f32.gmra.mxu0 %v325
    %v327 = vpop.f32.mrf.mxu0
    %v328 = vadd.f32 %v220, %v327
    %v329 = vpop.f32.mrf.mxu0
    %330 = vmatprep.mubr.f32.mxu0 0.0
    %v331 = vand.u32 %v123, 4294901760
    %332 = vmatmul.mubr.f32.gmra.mxu0 %v331
    %v333 = vpop.f32.mrf.mxu0
    %v334 = vadd.f32 %v230, %v333
    %v335 = vpop.f32.mrf.mxu0
    %336 = vdwg.mxu0
    %337 = vmatprep.subr.mxu0 0.0
    %338 = vmatpush1.msra.mxu0 0.0
    %339 = vmatprep.subr.mxu0 0.0
    %340 = vmatpush1.msra.mxu0 0.0
    %341 = vmatprep.subr.mxu0 0.0
    %342 = vmatpush1.msra.mxu0 0.0
    %343 = vmatprep.subr.mxu0 0.0
    %344 = vmatpush1.msra.mxu0 0.0
    %345 = vmatprep.subr.mxu0 0.0
    %346 = vmatpush1.msra.mxu0 0.0
    %347 = vmatprep.subr.mxu0 0.0
    %348 = vmatpush1.msra.mxu0 0.0
    %349 = vmatprep.subr.mxu0 0.0
    %350 = vmatpush1.msra.mxu0 0.0
    %351 = vmatprep.subr.mxu0 0.0
    %352 = vmatpush1.msra.mxu0 0.0
    %353 = vmatprep.subr.mxu0 0.0
    %354 = vmatpush1.msra.mxu0 0.0
    %355 = vmatprep.subr.mxu0 0.0
    %356 = vmatpush1.msra.mxu0 0.0
    %357 = vmatprep.subr.mxu0 0.0
    %358 = vmatpush1.msra.mxu0 0.0
    %359 = vmatprep.subr.mxu0 0.0
    %360 = vmatpush1.msra.mxu0 0.0
    %361 = vmatprep.subr.mxu0 0.0
    %362 = vmatpush1.msra.mxu0 0.0
    %363 = vmatprep.subr.mxu0 0.0
    %v364 = vand.u32 %v112, 4294901760
    %v365 = vsub.f32 %v112, %v364
    %366 = vmatpush1.msra.mxu0 %v365
    %367 = vmatprep.subr.mxu0 0.0
    %v368 = vand.u32 %v111, 4294901760
    %v369 = vsub.f32 %v111, %v368
    %370 = vmatpush1.msra.mxu0 %v369
    %371 = vmatprep.subr.mxu0 0.0
    %v372 = vand.u32 %v110, 4294901760
    %v373 = vsub.f32 %v110, %v372
    %374 = vmatpush1.msra.mxu0 %v373
    %375 = vmatprep.subr.mxu0 0.0
    %376 = vmatpush2.msra.mxu0 0.0
    %377 = vmatprep.subr.mxu0 0.0
    %378 = vmatpush2.msra.mxu0 0.0
    %379 = vmatprep.subr.mxu0 0.0
    %380 = vmatpush2.msra.mxu0 0.0
    %381 = vmatprep.subr.mxu0 0.0
    %382 = vmatpush2.msra.mxu0 0.0
    %383 = vmatprep.subr.mxu0 0.0
    %384 = vmatpush2.msra.mxu0 0.0
    %385 = vmatprep.subr.mxu0 0.0
    %386 = vmatpush2.msra.mxu0 0.0
    %387 = vmatprep.subr.mxu0 0.0
    %388 = vmatpush2.msra.mxu0 0.0
    %389 = vmatprep.subr.mxu0 0.0
    %390 = vmatpush2.msra.mxu0 0.0
    %391 = vmatprep.subr.mxu0 0.0
    %392 = vmatpush2.msra.mxu0 0.0
    %393 = vmatprep.subr.mxu0 0.0
    %394 = vmatpush2.msra.mxu0 0.0
    %395 = vmatprep.subr.mxu0 0.0
    %396 = vmatpush2.msra.mxu0 0.0
    %397 = vmatprep.subr.mxu0 0.0
    %398 = vmatpush2.msra.mxu0 0.0
    %399 = vmatprep.subr.mxu0 0.0
    %400 = vmatpush2.msra.mxu0 0.0
    %401 = vmatprep.subr.mxu0 0.0
    %402 = vmatpush2.msra.mxu0 0.0
    %403 = vmatprep.subr.mxu0 0.0
    %404 = vmatpush2.msra.mxu0 0.0
    %405 = vmatprep.subr.mxu0 0.0
    %406 = vmatpush2.msra.mxu0 0.0
    %407 = vmatprep.mubr.f32.mxu0 0.0
    %v408 = vand.u32 %v114, 4294901760
    %v409 = vsub.f32 %v114, %v408
    %410 = vmatmul.mubr.f32.gmra.mxu0 %v409
    %v411 = vpop.f32.mrf.mxu0
    %v412 = vadd.f32 %v316, %v411
    %v413 = vpop.f32.mrf.mxu0
    %414 = vmatprep.mubr.f32.mxu0 0.0
    %v415 = vand.u32 %v117, 4294901760
    %v416 = vsub.f32 %v117, %v415
    %417 = vmatmul.mubr.f32.gmra.mxu0 %v416
    %v418 = vpop.f32.mrf.mxu0
    %v419 = vadd.f32 %v322, %v418
    %v420 = vpop.f32.mrf.mxu0
    %421 = vmatprep.mubr.f32.mxu0 0.0
    %v422 = vand.u32 %v120, 4294901760
    %v423 = vsub.f32 %v120, %v422
    %424 = vmatmul.mubr.f32.gmra.mxu0 %v423
    %v425 = vpop.f32.mrf.mxu0
    %v426 = vadd.f32 %v328, %v425
    %v427 = vpop.f32.mrf.mxu0
    %428 = vmatprep.mubr.f32.mxu0 0.0
    %v429 = vand.u32 %v123, 4294901760
    %v430 = vsub.f32 %v123, %v429
    %431 = vmatmul.mubr.f32.gmra.mxu0 %v430
    %v432 = vpop.f32.mrf.mxu0
    %v433 = vadd.f32 %v334, %v432
    %v434 = vpop.f32.mrf.mxu0
    %435 = vdwg.mxu0
    %436 = vmatprep.subr.mxu0 0.0
    %437 = vmatpush1.msra.mxu0 0.0
    %438 = vmatprep.subr.mxu0 0.0
    %439 = vmatpush1.msra.mxu0 0.0
    %440 = vmatprep.subr.mxu0 0.0
    %441 = vmatpush1.msra.mxu0 0.0
    %442 = vmatprep.subr.mxu0 0.0
    %443 = vmatpush1.msra.mxu0 0.0
    %444 = vmatprep.subr.mxu0 0.0
    %445 = vmatpush1.msra.mxu0 0.0
    %446 = vmatprep.subr.mxu0 0.0
    %447 = vmatpush1.msra.mxu0 0.0
    %448 = vmatprep.subr.mxu0 0.0
    %449 = vmatpush1.msra.mxu0 0.0
    %450 = vmatprep.subr.mxu0 0.0
    %451 = vmatpush1.msra.mxu0 0.0
    %452 = vmatprep.subr.mxu0 0.0
    %453 = vmatpush1.msra.mxu0 0.0
    %454 = vmatprep.subr.mxu0 0.0
    %455 = vmatpush1.msra.mxu0 0.0
    %456 = vmatprep.subr.mxu0 0.0
    %457 = vmatpush1.msra.mxu0 0.0
    %458 = vmatprep.subr.mxu0 0.0
    %459 = vmatpush1.msra.mxu0 0.0
    %460 = vmatprep.subr.mxu0 0.0
    %461 = vmatpush1.msra.mxu0 0.0
    %462 = vmatprep.subr.mxu0 0.0
    %v463 = vand.u32 %v112, 4294901760
    %464 = vmatpush1.msra.mxu0 %v463
    %465 = vmatprep.subr.mxu0 0.0
    %v466 = vand.u32 %v111, 4294901760
    %467 = vmatpush1.msra.mxu0 %v466
    %468 = vmatprep.subr.mxu0 0.0
    %v469 = vand.u32 %v110, 4294901760
    %470 = vmatpush1.msra.mxu0 %v469
    %471 = vmatprep.subr.mxu0 0.0
    %472 = vmatpush2.msra.mxu0 0.0
    %473 = vmatprep.subr.mxu0 0.0
    %474 = vmatpush2.msra.mxu0 0.0
    %475 = vmatprep.subr.mxu0 0.0
    %476 = vmatpush2.msra.mxu0 0.0
    %477 = vmatprep.subr.mxu0 0.0
    %478 = vmatpush2.msra.mxu0 0.0
    %479 = vmatprep.subr.mxu0 0.0
    %480 = vmatpush2.msra.mxu0 0.0
    %481 = vmatprep.subr.mxu0 0.0
    %482 = vmatpush2.msra.mxu0 0.0
    %483 = vmatprep.subr.mxu0 0.0
    %484 = vmatpush2.msra.mxu0 0.0
    %485 = vmatprep.subr.mxu0 0.0
    %486 = vmatpush2.msra.mxu0 0.0
    %487 = vmatprep.subr.mxu0 0.0
    %488 = vmatpush2.msra.mxu0 0.0
    %489 = vmatprep.subr.mxu0 0.0
    %490 = vmatpush2.msra.mxu0 0.0
    %491 = vmatprep.subr.mxu0 0.0
    %492 = vmatpush2.msra.mxu0 0.0
    %493 = vmatprep.subr.mxu0 0.0
    %494 = vmatpush2.msra.mxu0 0.0
    %495 = vmatprep.subr.mxu0 0.0
    %496 = vmatpush2.msra.mxu0 0.0
    %497 = vmatprep.subr.mxu0 0.0
    %498 = vmatpush2.msra.mxu0 0.0
    %499 = vmatprep.subr.mxu0 0.0
    %500 = vmatpush2.msra.mxu0 0.0
    %501 = vmatprep.subr.mxu0 0.0
    %502 = vmatpush2.msra.mxu0 0.0
    %503 = vmatprep.mubr.f32.mxu0 0.0
    %v504 = vand.u32 %v114, 4294901760
    %v505 = vsub.f32 %v114, %v504
    %v506 = vand.u32 %v505, 4294901760
    %507 = vmatmul.mubr.f32.gmra.mxu0 %v506
    %v508 = vpop.f32.mrf.mxu0
    %v509 = vadd.f32 %v412, %v508
    %v510 = vpop.f32.mrf.mxu0
    %511 = vmatprep.mubr.f32.mxu0 0.0
    %v512 = vand.u32 %v117, 4294901760
    %v513 = vsub.f32 %v117, %v512
    %v514 = vand.u32 %v513, 4294901760
    %515 = vmatmul.mubr.f32.gmra.mxu0 %v514
    %v516 = vpop.f32.mrf.mxu0
    %v517 = vadd.f32 %v419, %v516
    %v518 = vpop.f32.mrf.mxu0
    %519 = vmatprep.mubr.f32.mxu0 0.0
    %v520 = vand.u32 %v120, 4294901760
    %v521 = vsub.f32 %v120, %v520
    %v522 = vand.u32 %v521, 4294901760
    %523 = vmatmul.mubr.f32.gmra.mxu0 %v522
    %v524 = vpop.f32.mrf.mxu0
    %v525 = vadd.f32 %v426, %v524
    %v526 = vpop.f32.mrf.mxu0
    %527 = vmatprep.mubr.f32.mxu0 0.0
    %v528 = vand.u32 %v123, 4294901760
    %v529 = vsub.f32 %v123, %v528
    %v530 = vand.u32 %v529, 4294901760
    %531 = vmatmul.mubr.f32.gmra.mxu0 %v530
    %v532 = vpop.f32.mrf.mxu0
    %v533 = vadd.f32 %v433, %v532
    %v534 = vpop.f32.mrf.mxu0
    %535 = vdwg.mxu0
    %536 = vmatprep.subr.mxu0 0.0
    %537 = vmatpush1.msra.mxu0 0.0
    %538 = vmatprep.subr.mxu0 0.0
    %539 = vmatpush1.msra.mxu0 0.0
    %540 = vmatprep.subr.mxu0 0.0
    %541 = vmatpush1.msra.mxu0 0.0
    %542 = vmatprep.subr.mxu0 0.0
    %543 = vmatpush1.msra.mxu0 0.0
    %544 = vmatprep.subr.mxu0 0.0
    %545 = vmatpush1.msra.mxu0 0.0
    %546 = vmatprep.subr.mxu0 0.0
    %547 = vmatpush1.msra.mxu0 0.0
    %548 = vmatprep.subr.mxu0 0.0
    %549 = vmatpush1.msra.mxu0 0.0
    %550 = vmatprep.subr.mxu0 0.0
    %551 = vmatpush1.msra.mxu0 0.0
    %552 = vmatprep.subr.mxu0 0.0
    %553 = vmatpush1.msra.mxu0 0.0
    %554 = vmatprep.subr.mxu0 0.0
    %555 = vmatpush1.msra.mxu0 0.0
    %556 = vmatprep.subr.mxu0 0.0
    %557 = vmatpush1.msra.mxu0 0.0
    %558 = vmatprep.subr.mxu0 0.0
    %559 = vmatpush1.msra.mxu0 0.0
    %560 = vmatprep.subr.mxu0 0.0
    %561 = vmatpush1.msra.mxu0 0.0
    %562 = vmatprep.subr.mxu0 0.0
    %v563 = vand.u32 %v112, 4294901760
    %v564 = vsub.f32 %v112, %v563
    %v565 = vand.u32 %v564, 4294901760
    %566 = vmatpush1.msra.mxu0 %v565
    %567 = vmatprep.subr.mxu0 0.0
    %v568 = vand.u32 %v111, 4294901760
    %v569 = vsub.f32 %v111, %v568
    %v570 = vand.u32 %v569, 4294901760
    %571 = vmatpush1.msra.mxu0 %v570
    %572 = vmatprep.subr.mxu0 0.0
    %v573 = vand.u32 %v110, 4294901760
    %v574 = vsub.f32 %v110, %v573
    %v575 = vand.u32 %v574, 4294901760
    %576 = vmatpush1.msra.mxu0 %v575
    %577 = vmatprep.subr.mxu0 0.0
    %578 = vmatpush2.msra.mxu0 0.0
    %579 = vmatprep.subr.mxu0 0.0
    %580 = vmatpush2.msra.mxu0 0.0
    %581 = vmatprep.subr.mxu0 0.0
    %582 = vmatpush2.msra.mxu0 0.0
    %583 = vmatprep.subr.mxu0 0.0
    %584 = vmatpush2.msra.mxu0 0.0
    %585 = vmatprep.subr.mxu0 0.0
    %586 = vmatpush2.msra.mxu0 0.0
    %587 = vmatprep.subr.mxu0 0.0
    %588 = vmatpush2.msra.mxu0 0.0
    %589 = vmatprep.subr.mxu0 0.0
    %590 = vmatpush2.msra.mxu0 0.0
    %591 = vmatprep.subr.mxu0 0.0
    %592 = vmatpush2.msra.mxu0 0.0
    %593 = vmatprep.subr.mxu0 0.0
    %594 = vmatpush2.msra.mxu0 0.0
    %595 = vmatprep.subr.mxu0 0.0
    %596 = vmatpush2.msra.mxu0 0.0
    %597 = vmatprep.subr.mxu0 0.0
    %598 = vmatpush2.msra.mxu0 0.0
    %599 = vmatprep.subr.mxu0 0.0
    %600 = vmatpush2.msra.mxu0 0.0
    %601 = vmatprep.subr.mxu0 0.0
    %602 = vmatpush2.msra.mxu0 0.0
    %603 = vmatprep.subr.mxu0 0.0
    %604 = vmatpush2.msra.mxu0 0.0
    %605 = vmatprep.subr.mxu0 0.0
    %606 = vmatpush2.msra.mxu0 0.0
    %607 = vmatprep.subr.mxu0 0.0
    %608 = vmatpush2.msra.mxu0 0.0
    %609 = vmatprep.mubr.f32.mxu0 0.0
    %v610 = vand.u32 %v114, 4294901760
    %611 = vmatmul.mubr.f32.gmra.mxu0 %v610
    %v612 = vpop.f32.mrf.mxu0
    %v613 = vadd.f32 %v509, %v612
    %v614 = vpop.f32.mrf.mxu0
    %615 = vmatprep.mubr.f32.mxu0 0.0
    %v616 = vand.u32 %v117, 4294901760
    %617 = vmatmul.mubr.f32.gmra.mxu0 %v616
    %v618 = vpop.f32.mrf.mxu0
    %v619 = vadd.f32 %v517, %v618
    %v620 = vpop.f32.mrf.mxu0
    %621 = vmatprep.mubr.f32.mxu0 0.0
    %v622 = vand.u32 %v120, 4294901760
    %623 = vmatmul.mubr.f32.gmra.mxu0 %v622
    %v624 = vpop.f32.mrf.mxu0
    %v625 = vadd.f32 %v525, %v624
    %v626 = vpop.f32.mrf.mxu0
    %627 = vmatprep.mubr.f32.mxu0 0.0
    %v628 = vand.u32 %v123, 4294901760
    %629 = vmatmul.mubr.f32.gmra.mxu0 %v628
    %v630 = vpop.f32.mrf.mxu0
    %v631 = vadd.f32 %v533, %v630
    %v632 = vpop.f32.mrf.mxu0
    %633 = vdwg.mxu0
    %634 = vmatprep.subr.mxu0 0.0
    %635 = vmatpush1.msra.mxu0 0.0
    %636 = vmatprep.subr.mxu0 0.0
    %637 = vmatpush1.msra.mxu0 0.0
    %638 = vmatprep.subr.mxu0 0.0
    %639 = vmatpush1.msra.mxu0 0.0
    %640 = vmatprep.subr.mxu0 0.0
    %641 = vmatpush1.msra.mxu0 0.0
    %642 = vmatprep.subr.mxu0 0.0
    %643 = vmatpush1.msra.mxu0 0.0
    %644 = vmatprep.subr.mxu0 0.0
    %645 = vmatpush1.msra.mxu0 0.0
    %646 = vmatprep.subr.mxu0 0.0
    %647 = vmatpush1.msra.mxu0 0.0
    %648 = vmatprep.subr.mxu0 0.0
    %649 = vmatpush1.msra.mxu0 0.0
    %650 = vmatprep.subr.mxu0 0.0
    %651 = vmatpush1.msra.mxu0 0.0
    %652 = vmatprep.subr.mxu0 0.0
    %653 = vmatpush1.msra.mxu0 0.0
    %654 = vmatprep.subr.mxu0 0.0
    %655 = vmatpush1.msra.mxu0 0.0
    %656 = vmatprep.subr.mxu0 0.0
    %657 = vmatpush1.msra.mxu0 0.0
    %658 = vmatprep.subr.mxu0 0.0
    %659 = vmatpush1.msra.mxu0 0.0
    %660 = vmatprep.subr.mxu0 0.0
    %v661 = vand.u32 %v112, 4294901760
    %662 = vmatpush1.msra.mxu0 %v661
    %663 = vmatprep.subr.mxu0 0.0
    %v664 = vand.u32 %v111, 4294901760
    %665 = vmatpush1.msra.mxu0 %v664
    %666 = vmatprep.subr.mxu0 0.0
    %v667 = vand.u32 %v110, 4294901760
    %668 = vmatpush1.msra.mxu0 %v667
    %669 = vmatprep.subr.mxu0 0.0
    %670 = vmatpush2.msra.mxu0 0.0
    %671 = vmatprep.subr.mxu0 0.0
    %672 = vmatpush2.msra.mxu0 0.0
    %673 = vmatprep.subr.mxu0 0.0
    %674 = vmatpush2.msra.mxu0 0.0
    %675 = vmatprep.subr.mxu0 0.0
    %676 = vmatpush2.msra.mxu0 0.0
    %677 = vmatprep.subr.mxu0 0.0
    %678 = vmatpush2.msra.mxu0 0.0
    %679 = vmatprep.subr.mxu0 0.0
    %680 = vmatpush2.msra.mxu0 0.0
    %681 = vmatprep.subr.mxu0 0.0
    %682 = vmatpush2.msra.mxu0 0.0
    %683 = vmatprep.subr.mxu0 0.0
    %684 = vmatpush2.msra.mxu0 0.0
    %685 = vmatprep.subr.mxu0 0.0
    %686 = vmatpush2.msra.mxu0 0.0
    %687 = vmatprep.subr.mxu0 0.0
    %688 = vmatpush2.msra.mxu0 0.0
    %689 = vmatprep.subr.mxu0 0.0
    %690 = vmatpush2.msra.mxu0 0.0
    %691 = vmatprep.subr.mxu0 0.0
    %692 = vmatpush2.msra.mxu0 0.0
    %693 = vmatprep.subr.mxu0 0.0
    %694 = vmatpush2.msra.mxu0 0.0
    %695 = vmatprep.subr.mxu0 0.0
    %696 = vmatpush2.msra.mxu0 0.0
    %697 = vmatprep.subr.mxu0 0.0
    %698 = vmatpush2.msra.mxu0 0.0
    %699 = vmatprep.subr.mxu0 0.0
    %700 = vmatpush2.msra.mxu0 0.0
    %701 = vmatprep.mubr.f32.mxu0 0.0
    %v702 = vand.u32 %v114, 4294901760
    %703 = vmatmul.mubr.f32.gmra.mxu0 %v702
    %v704 = vpop.f32.mrf.mxu0
    %v705 = vadd.f32 %v613, %v704
    %v706 = vpop.f32.mrf.mxu0
    %707 = vmatprep.mubr.f32.mxu0 0.0
    %v708 = vand.u32 %v117, 4294901760
    %709 = vmatmul.mubr.f32.gmra.mxu0 %v708
    %v710 = vpop.f32.mrf.mxu0
    %v711 = vadd.f32 %v619, %v710
    %v712 = vpop.f32.mrf.mxu0
    %713 = vmatprep.mubr.f32.mxu0 0.0
    %v714 = vand.u32 %v120, 4294901760
    %715 = vmatmul.mubr.f32.gmra.mxu0 %v714
    %v716 = vpop.f32.mrf.mxu0
    %v717 = vadd.f32 %v625, %v716
    %v718 = vpop.f32.mrf.mxu0
    %719 = vmatprep.mubr.f32.mxu0 0.0
    %v720 = vand.u32 %v123, 4294901760
    %721 = vmatmul.mubr.f32.gmra.mxu0 %v720
    %v722 = vpop.f32.mrf.mxu0
    %v723 = vadd.f32 %v631, %v722
    %v724 = vpop.f32.mrf.mxu0
    %725 = vdwg.mxu0
    %v726 = vlaneseq
    %v727 = vshrl.u32 %v726, 7
    %v728 = vadd.s32 %v727, 8
    %v729 = vadd.s32 %v727, 16
    %v730 = vadd.s32 %v727, 24
    %s731 = sadd.s32 0, 0
    %s732 = smul.u32 %s731, 32
    %v733 = vstv %s732
    %v734 = vadd.s32 %v733, %v727
    %v735 = vadd.s32 %v733, %v728
    %v736 = vadd.s32 %v733, %v729
    %v737 = vadd.s32 %v733, %v730
    %vm738 = vcmp.lt.s32.totalorder %v734, 8
    %vm739 = vcmp.lt.s32.totalorder %v735, 8
    %vm740 = vcmp.lt.s32.totalorder %v736, 8
    %vm741 = vcmp.lt.s32.totalorder %v737, 8
    %v742 = vrcp.pop %v100
    %v743 = vmul.f32 1.0, %v742
    %v744 = vrcp.pop %v103
    %v745 = vmul.f32 1.0, %v744
    %v746 = vrcp.pop %v106
    %v747 = vmul.f32 1.0, %v746
    %v748 = vrcp.pop %v109
    %v749 = vmul.f32 1.0, %v748
    %v750 = vsel %vm738, %v743, 0.0
    %v751 = vsel %vm739, %v745, 0.0
    %v752 = vsel %vm740, %v747, 0.0
    %v753 = vsel %vm741, %v749, 0.0
    %v754 = vlaneseq
    %v755 = vand.u32 %v754, 127
    %756 = vset.pattern.permute.xlu0 0
    %757 = vperm.xlu0 %756, %v69
    %v758 = vpop.permute.xlu0 %757
    %759 = vset.pattern.permute.xlu0 0
    %760 = vperm.xlu0 %759, %v70
    %v761 = vpop.permute.xlu0 %760
    %762 = vset.pattern.permute.xlu0 0
    %763 = vperm.xlu0 %762, %v71
    %v764 = vpop.permute.xlu0 %763
    %765 = vset.pattern.permute.xlu0 0
    %766 = vperm.xlu0 %765, %v72
    %v767 = vpop.permute.xlu0 %766
    %vm768 = vcmp.eq.s32.totalorder %v755, %v758
    %vm769 = vcmp.eq.s32.totalorder %v755, %v761
    %vm770 = vcmp.eq.s32.totalorder %v755, %v764
    %vm771 = vcmp.eq.s32.totalorder %v755, %v767
    %v772 = vsel %vm768, %v705, 0.0
    %v773 = vsel %vm769, %v711, 0.0
    %v774 = vsel %vm770, %v717, 0.0
    %v775 = vsel %vm771, %v723, 0.0
    %v776 = vmul.f32 %v772, %v750
    %v777 = vmul.f32 %v773, %v751
    %v778 = vmul.f32 %v774, %v752
    %v779 = vmul.f32 %v775, %v753
    %v780 = vld [vmem:[#allocation2] sm:$0xff]
    %v781 = vsel %vm73, %v776, 0.0
    %v782 = vsel %vm73, %v777, 0.0
    %v783 = vadd.f32 %v781, %v782
    %v784 = vsel %vm73, %v778, 0.0
    %v785 = vadd.f32 %v783, %v784
    %v786 = vsel %vm73, %v779, 0.0
    %v787 = vadd.f32 %v785, %v786
    %v788 = vadd.f32 %v780, %v787
    %789 = vst.msk [vmem:[#allocation2] sm:$0xff] %vm73, %v788
    // Predicated region
    $region18: #{tpu_custom_call.1} parent=1 // pred_check
      %p790 = pneg %p59
    $region19: #{tpu_custom_call.1} parent=1 // pred_check_branch
      %792 = sbr.rel (%p790) target = $region21
    $region20: #{tpu_custom_call.1} parent=1 // pred_region
      %v793 = vld [vmem:[#allocation2] sm:$0xff]
      %v794 = vsel %vm73, %v793, 0.0
      %795 = vadd.xlane.f32.xlu0 %v794
      %v796 = vpop.xlane.xlu0 %795
      %v797 = vrot.slane %v796, 4
      %v798 = vadd.f32 %v796, %v797
      %v799 = vrot.slane %v798, 2
      %v800 = vadd.f32 %v798, %v799
      %v801 = vrot.slane %v800, 1
      %v802 = vadd.f32 %v800, %v801
      %s803 = vtos %v802
      %s804 = smul.f32 %s803, 0.125
      %v805 = vstv %s804
      %v806 = vadd.f32 %v805, 0.0
      %807 = vst [vmem:[#allocation3] sm:$0xff] %v806
    $region21: #{tpu_custom_call.1} parent=1 // pred_fallthru
      _
    // Predicated region
    $region22: #{tpu_custom_call.1} parent=1 // pred_check
      _
    $region23: #{tpu_custom_call.1} parent=1 // pred_check_branch
      %809 = sbr.rel (0) target = $region25
    $region24: #{tpu_custom_call.1} parent=1 // pred_region
      %s811 = ssub.s32 128, 128
      %812 = vsyncadd [#allocation4], %s811
      %s814 = sshll.u32 [#allocation3], 4
      %s815 = int_to_ptr.vmem [resolvable:$true] %s814
      %817 = dma.vmem_to_hbm [thread:$0]  %s815, 128, %s3, [#allocation4]
    $region25: #{tpu_custom_call.1} parent=1 // pred_fallthru
      _
    // Predicated region
    $region26: #{tpu_custom_call.1} parent=1 // pred_check
      _
    $region27: #{tpu_custom_call.1} parent=1 // pred_check_branch
      %819 = sbr.rel (0) target = $region29
    $region28: #{tpu_custom_call.1} parent=1 // pred_region
      %820 = dma.done [#allocation4], 128
    $region29: #{tpu_custom_call.1} parent=1 // pred_fallthru
      _
    %821 = vsyncpa [#allocation4], 1

</llo_original>
